<compile_context>
chip_gen: v7x
topology: tpu7x:2x2x1
jax: 0.10.0
libtpu: 0.0.40
codegen_flags: <defaults>
</compile_context>

<pallas_src>
import functools

import jax
import jax.numpy as jnp
from jax import lax
from jax.experimental import pallas as pl
from jax.experimental.pallas import tpu as pltpu


def _round_up(x, m):
    return ((x + m - 1) // m) * m


def _rnn_kernel(ids_ref, emb_ref, wih_ref, whh_ref, b_ref, wl_ref, bl_ref,
                out_ref, *, T, B_pad):
    """Whole-sequence RNN forward in one kernel invocation (no grid).

    ids_ref : (T*B_pad, 1) int32   time-major token ids (batch padded with id 0)
    emb_ref : (V_pad, E_pad)       zero-padded embedding table (VMEM resident)
    wih_ref : (E_pad, H)           input->hidden weight (transposed vs PyTorch, E padded)
    whh_ref : (H, H)               hidden->hidden weight (transposed vs PyTorch)
    b_ref   : (1, H)               b_ih + b_hh
    wl_ref  : (H, C_pad)           linear weight, zero-padded to 128 lanes
    bl_ref  : (1, C_pad)           linear bias, zero-padded
    out_ref : (T*B_pad, C_pad)     time-major logits (lane-dense store)
    """
    TBp = T * B_pad
    V_pad = emb_ref.shape[0]
    H = whh_ref.shape[0]

    # 1) Fused embedding gather: one-hot(ids) @ table on the MXU.  Exact (0/1 weights),
    #    and the gathered activations never leave VMEM/vregs.
    ids = ids_ref[...]                                               # (T*B_pad, 1) int32
    lane_iota = lax.broadcasted_iota(jnp.int32, (TBp, V_pad), 1)     # (T*B_pad, V_pad)
    onehot = jnp.where(ids == lane_iota, 1.0, 0.0)                   # f32 one-hot
    x = jnp.dot(onehot, emb_ref[...], preferred_element_type=jnp.float32)   # (T*B_pad, E_pad)

    # 2) Hoisted, time-parallel input projection (+ fused RNN biases): one big MXU pass
    #    instead of T small ones on the serial path.  Padded E lanes are zeros -> exact.
    xproj = jnp.dot(x, wih_ref[...], preferred_element_type=jnp.float32) + b_ref[...]

    # 3) Serial recurrence, fully unrolled (T small & static).  B_pad = 8 sublanes, so
    #    each per-step slice is a whole sublane group; hidden states stay in registers.
    whh = whh_ref[...]
    h = jnp.zeros((B_pad, H), jnp.float32)
    hs = []
    for t in range(T):                       # static Python loop -> static slices
        h = jnp.tanh(
            xproj[t * B_pad:(t + 1) * B_pad, :]
            + jnp.dot(h, whh, preferred_element_type=jnp.float32)
        )
        hs.append(h)
    hs_tm = jnp.concatenate(hs, axis=0)      # (T*B_pad, H), time-major, in vregs

    # 4) Hoisted linear head: single (T*B_pad, H) @ (H, C_pad) matmul, then one
    #    lane-dense (multiple-of-128) unmasked store.
    out_ref[...] = (
        jnp.dot(hs_tm, wl_ref[...], preferred_element_type=jnp.float32) + bl_ref[...]
    ).astype(out_ref.dtype)


def prepare_params(params):
    """One-time parameter prep: pad everything to TPU-friendly shapes (done once,
    NOT per forward call)."""
    emb = params["embedding"].astype(jnp.float32)     # (V, E)
    w_ih = params["w_ih"].astype(jnp.float32)         # (E, H)
    w_hh = params["w_hh"].astype(jnp.float32)         # (H, H)
    b_rnn = params["b_rnn"].astype(jnp.float32)       # (1, H)
    w_lin = params["w_lin"].astype(jnp.float32)       # (H, C)
    b_lin = params["b_lin"].astype(jnp.float32)       # (1, C)

    V, E = emb.shape
    H = w_hh.shape[0]
    C = w_lin.shape[1]
    V_pad = _round_up(V, 128)      # contraction/lane dim of the one-hot gather
    E_pad = _round_up(E, 128)      # clean K for the input projection
    C_pad = _round_up(C, 128)      # lane-dense head output

    emb_pad = jnp.zeros((V_pad, E_pad), jnp.float32).at[:V, :E].set(emb)
    w_ih_pad = jnp.zeros((E_pad, H), jnp.float32).at[:E, :].set(w_ih)
    w_lin_pad = jnp.zeros((H, C_pad), jnp.float32).at[:, :C].set(w_lin)
    b_lin_pad = jnp.zeros((1, C_pad), jnp.float32).at[:, :C].set(b_lin)

    return {
        "emb": emb_pad, "w_ih": w_ih_pad, "w_hh": w_hh, "b_rnn": b_rnn,
        "w_lin": w_lin_pad, "b_lin": b_lin_pad,
    }


@functools.partial(jax.jit, static_argnames=("num_classes",))
def rnn_model_forward(sentence, prepped, *, num_classes):
    """Forward pass of RnnModel.

    sentence : (B, T) int32 token ids (batch-first, like the PyTorch module)
    prepped  : output of prepare_params (padded, TPU-ready parameters)
    returns  : (B, T, num_classes) float32 logits
    """
    B, T = sentence.shape
    B_pad = max(_round_up(B, 8), 8)            # full sublane group per time step
    C_pad = prepped["w_lin"].shape[1]

    # Time-major ids with the batch padded to 8 rows.  Pad rows use token 0 (the
    # module's padding_idx) and are sliced off after the kernel.  Under jit this
    # id-layout prep fuses into one tiny fusion.
    ids_tm = jnp.zeros((T, B_pad), jnp.int32).at[:, :B].set(
        jnp.transpose(sentence).astype(jnp.int32))
    ids_col = ids_tm.reshape(T * B_pad, 1)

    kernel = functools.partial(_rnn_kernel, T=T, B_pad=B_pad)

    out_flat = pl.pallas_call(
        kernel,
        out_shape=jax.ShapeDtypeStruct((T * B_pad, C_pad), jnp.float32),
        in_specs=[pl.BlockSpec(memory_space=pltpu.MemorySpace.VMEM)] * 7,
        out_specs=pl.BlockSpec(memory_space=pltpu.MemorySpace.VMEM),
    )(ids_col, prepped["emb"], prepped["w_ih"], prepped["w_hh"],
      prepped["b_rnn"], prepped["w_lin"], prepped["b_lin"])

    # (T*B_pad, C_pad) -> (B, T, C); reshape is metadata-only and the slice+transpose
    # fuse into a single tiny XLA fusion under jit.
    out = out_flat.reshape(T, B_pad, C_pad)[:, :B, :num_classes]
    return jnp.transpose(out, (1, 0, 2))


def _reference_forward(sentence, params):
    """Pure-JAX reference (same math as nn.RNN tanh + Linear), high-precision dots."""
    embeds = jnp.take(params["embedding"], sentence, axis=0)       # (B, T, E)
    B, _, _ = embeds.shape
    H = params["w_hh"].shape[0]

    def step(h, x_t):
        h_new = jnp.tanh(
            jnp.dot(x_t, params["w_ih"], precision="highest")
            + jnp.dot(h, params["w_hh"], precision="highest")
            + params["b_rnn"])
        return h_new, h_new

    _, hs = jax.lax.scan(step, jnp.zeros((B, H), jnp.float32),
                         jnp.transpose(embeds, (1, 0, 2)))
    hs = jnp.transpose(hs, (1, 0, 2))                              # (B, T, H)
    return jnp.dot(hs, params["w_lin"], precision="highest") + params["b_lin"]


if __name__ == "__main__":
    # Small shapes consistent with the module's forward.
    VOCAB = 50           # len(vocabulary) + 2 stand-in
    EMBEDDING_DIM = 100  # matches the script's EMBEDDING_DIM
    HIDDEN = 32
    NUM_CLASSES = 4
    B, T = 2, 8

    key = jax.random.PRNGKey(0)
    k_emb, k_ih, k_hh, k_bi, k_bh, k_wl, k_bl, k_sent = jax.random.split(key, 8)

    # Deterministic synthetic parameters (shapes follow the PyTorch module's __init__);
    # the gensim/GloVe table is replaced by a random table, as in the original script.
    emb_table = jax.random.normal(k_emb, (VOCAB, EMBEDDING_DIM), jnp.float32) / 10.0
    bound = 1.0 / jnp.sqrt(HIDDEN)
    w_ih_pt = jax.random.uniform(k_ih, (HIDDEN, EMBEDDING_DIM), jnp.float32, -bound, bound)
    w_hh_pt = jax.random.uniform(k_hh, (HIDDEN, HIDDEN), jnp.float32, -bound, bound)
    b_ih = jax.random.uniform(k_bi, (HIDDEN,), jnp.float32, -bound, bound)
    b_hh = jax.random.uniform(k_bh, (HIDDEN,), jnp.float32, -bound, bound)
    w_lin_pt = jax.random.uniform(k_wl, (NUM_CLASSES, HIDDEN), jnp.float32, -bound, bound)
    b_lin = jax.random.uniform(k_bl, (NUM_CLASSES,), jnp.float32, -bound, bound)

    params = {
        "embedding": emb_table,
        "w_ih": w_ih_pt.T,                      # (E, H)
        "w_hh": w_hh_pt.T,                      # (H, H)
        "b_rnn": (b_ih + b_hh)[None, :],        # (1, H)  (= b_ih + b_hh)
        "w_lin": w_lin_pt.T,                    # (H, C)
        "b_lin": b_lin[None, :],                # (1, C)
    }

    prepped = prepare_params(params)            # one-time padding / layout prep

    sentence = jax.random.randint(k_sent, (B, T), 0, VOCAB, dtype=jnp.int32)

    logits = rnn_model_forward(sentence, prepped, num_classes=NUM_CLASSES)
    logits = jax.block_until_ready(logits)

    ref = _reference_forward(sentence, params)
    assert logits.shape == (B, T, NUM_CLASSES)
    max_err = float(jnp.max(jnp.abs(logits - ref)))
    assert max_err < 1e-4, f"max abs error {max_err}"

    print("KERNEL_OK")
</pallas_src>

<mosaic_0001>
module attributes {stable_mosaic.version = 11 : i64} {
  func.func @_rnn_kernel(%arg0: memref<64x1xi32, #tpu.memory_space<vmem>>, %arg1: memref<128x128xf32, #tpu.memory_space<vmem>>, %arg2: memref<128x32xf32, #tpu.memory_space<vmem>>, %arg3: memref<32x32xf32, #tpu.memory_space<vmem>>, %arg4: memref<1x32xf32, #tpu.memory_space<vmem>>, %arg5: memref<32x128xf32, #tpu.memory_space<vmem>>, %arg6: memref<1x128xf32, #tpu.memory_space<vmem>>, %arg7: memref<64x128xf32, #tpu.memory_space<vmem>>) attributes {dimension_semantics = [], scalar_prefetch = 0 : i64, scratch_operands = 0 : i64, tpu.core_type = #tpu.core_type<tc>} {
    %c0 = arith.constant 0 : index
    %c0_0 = arith.constant 0 : index
    %0 = vector.load %arg0[%c0, %c0_0] : memref<64x1xi32, #tpu.memory_space<vmem>>, vector<64x1xi32>
    %1 = tpu.iota {dimensions = array<i32: 1>} : vector<64x128xi32>
    %2 = vector.broadcast %0 : vector<64x1xi32> to vector<64x128xi32>
    %3 = arith.cmpi eq, %2, %1 : vector<64x128xi32>
    %cst = arith.constant 1.000000e+00 : f32
    %cst_1 = arith.constant 0.000000e+00 : f32
    %4 = vector.broadcast %cst : f32 to vector<64x128xf32>
    %5 = vector.broadcast %cst_1 : f32 to vector<64x128xf32>
    %6 = arith.select %3, %4, %5 : vector<64x128xi1>, vector<64x128xf32>
    %c0_2 = arith.constant 0 : index
    %c0_3 = arith.constant 0 : index
    %7 = vector.load %arg1[%c0_2, %c0_3] : memref<128x128xf32, #tpu.memory_space<vmem>>, vector<128x128xf32>
    %cst_4 = arith.constant dense<0.000000e+00> : vector<64x128xf32>
    %8 = tpu.matmul %6, %7, %cst_4 {dimension_numbers = #tpu.dot_dimension_numbers<[1], [0], [0], [1], [0, 0, 1, 1], [], []>} : vector<64x128xf32>, vector<128x128xf32>, vector<64x128xf32> -> vector<64x128xf32>
    %c0_5 = arith.constant 0 : index
    %c0_6 = arith.constant 0 : index
    %9 = vector.load %arg2[%c0_5, %c0_6] : memref<128x32xf32, #tpu.memory_space<vmem>>, vector<128x32xf32>
    %cst_7 = arith.constant dense<0.000000e+00> : vector<64x32xf32>
    %10 = tpu.matmul %8, %9, %cst_7 {dimension_numbers = #tpu.dot_dimension_numbers<[1], [0], [0], [1], [0, 0, 1, 1], [], []>} : vector<64x128xf32>, vector<128x32xf32>, vector<64x32xf32> -> vector<64x32xf32>
    %c0_8 = arith.constant 0 : index
    %c0_9 = arith.constant 0 : index
    %11 = vector.load %arg4[%c0_8, %c0_9] : memref<1x32xf32, #tpu.memory_space<vmem>>, vector<1x32xf32>
    %12 = vector.broadcast %11 : vector<1x32xf32> to vector<64x32xf32>
    %13 = arith.addf %10, %12 : vector<64x32xf32>
    %c0_10 = arith.constant 0 : index
    %c0_11 = arith.constant 0 : index
    %14 = vector.load %arg3[%c0_10, %c0_11] : memref<32x32xf32, #tpu.memory_space<vmem>>, vector<32x32xf32>
    %cst_12 = arith.constant 0.000000e+00 : f32
    %15 = vector.broadcast %cst_12 : f32 to vector<8x32xf32>
    %16 = vector.extract_strided_slice %13 {offsets = [0, 0], sizes = [8, 32], strides = [1, 1]} : vector<64x32xf32> to vector<8x32xf32>
    %cst_13 = arith.constant dense<0.000000e+00> : vector<8x32xf32>
    %17 = tpu.matmul %15, %14, %cst_13 {dimension_numbers = #tpu.dot_dimension_numbers<[1], [0], [0], [1], [0, 0, 1, 1], [], []>} : vector<8x32xf32>, vector<32x32xf32>, vector<8x32xf32> -> vector<8x32xf32>
    %18 = arith.addf %16, %17 : vector<8x32xf32>
    %19 = math.tanh %18 : vector<8x32xf32>
    %20 = vector.extract_strided_slice %13 {offsets = [8, 0], sizes = [8, 32], strides = [1, 1]} : vector<64x32xf32> to vector<8x32xf32>
    %cst_14 = arith.constant dense<0.000000e+00> : vector<8x32xf32>
    %21 = tpu.matmul %19, %14, %cst_14 {dimension_numbers = #tpu.dot_dimension_numbers<[1], [0], [0], [1], [0, 0, 1, 1], [], []>} : vector<8x32xf32>, vector<32x32xf32>, vector<8x32xf32> -> vector<8x32xf32>
    %22 = arith.addf %20, %21 : vector<8x32xf32>
    %23 = math.tanh %22 : vector<8x32xf32>
    %24 = vector.extract_strided_slice %13 {offsets = [16, 0], sizes = [8, 32], strides = [1, 1]} : vector<64x32xf32> to vector<8x32xf32>
    %cst_15 = arith.constant dense<0.000000e+00> : vector<8x32xf32>
    %25 = tpu.matmul %23, %14, %cst_15 {dimension_numbers = #tpu.dot_dimension_numbers<[1], [0], [0], [1], [0, 0, 1, 1], [], []>} : vector<8x32xf32>, vector<32x32xf32>, vector<8x32xf32> -> vector<8x32xf32>
    %26 = arith.addf %24, %25 : vector<8x32xf32>
    %27 = math.tanh %26 : vector<8x32xf32>
    %28 = vector.extract_strided_slice %13 {offsets = [24, 0], sizes = [8, 32], strides = [1, 1]} : vector<64x32xf32> to vector<8x32xf32>
    %cst_16 = arith.constant dense<0.000000e+00> : vector<8x32xf32>
    %29 = tpu.matmul %27, %14, %cst_16 {dimension_numbers = #tpu.dot_dimension_numbers<[1], [0], [0], [1], [0, 0, 1, 1], [], []>} : vector<8x32xf32>, vector<32x32xf32>, vector<8x32xf32> -> vector<8x32xf32>
    %30 = arith.addf %28, %29 : vector<8x32xf32>
    %31 = math.tanh %30 : vector<8x32xf32>
    %32 = vector.extract_strided_slice %13 {offsets = [32, 0], sizes = [8, 32], strides = [1, 1]} : vector<64x32xf32> to vector<8x32xf32>
    %cst_17 = arith.constant dense<0.000000e+00> : vector<8x32xf32>
    %33 = tpu.matmul %31, %14, %cst_17 {dimension_numbers = #tpu.dot_dimension_numbers<[1], [0], [0], [1], [0, 0, 1, 1], [], []>} : vector<8x32xf32>, vector<32x32xf32>, vector<8x32xf32> -> vector<8x32xf32>
    %34 = arith.addf %32, %33 : vector<8x32xf32>
    %35 = math.tanh %34 : vector<8x32xf32>
    %36 = vector.extract_strided_slice %13 {offsets = [40, 0], sizes = [8, 32], strides = [1, 1]} : vector<64x32xf32> to vector<8x32xf32>
    %cst_18 = arith.constant dense<0.000000e+00> : vector<8x32xf32>
    %37 = tpu.matmul %35, %14, %cst_18 {dimension_numbers = #tpu.dot_dimension_numbers<[1], [0], [0], [1], [0, 0, 1, 1], [], []>} : vector<8x32xf32>, vector<32x32xf32>, vector<8x32xf32> -> vector<8x32xf32>
    %38 = arith.addf %36, %37 : vector<8x32xf32>
    %39 = math.tanh %38 : vector<8x32xf32>
    %40 = vector.extract_strided_slice %13 {offsets = [48, 0], sizes = [8, 32], strides = [1, 1]} : vector<64x32xf32> to vector<8x32xf32>
    %cst_19 = arith.constant dense<0.000000e+00> : vector<8x32xf32>
    %41 = tpu.matmul %39, %14, %cst_19 {dimension_numbers = #tpu.dot_dimension_numbers<[1], [0], [0], [1], [0, 0, 1, 1], [], []>} : vector<8x32xf32>, vector<32x32xf32>, vector<8x32xf32> -> vector<8x32xf32>
    %42 = arith.addf %40, %41 : vector<8x32xf32>
    %43 = math.tanh %42 : vector<8x32xf32>
    %44 = vector.extract_strided_slice %13 {offsets = [56, 0], sizes = [8, 32], strides = [1, 1]} : vector<64x32xf32> to vector<8x32xf32>
    %cst_20 = arith.constant dense<0.000000e+00> : vector<8x32xf32>
    %45 = tpu.matmul %43, %14, %cst_20 {dimension_numbers = #tpu.dot_dimension_numbers<[1], [0], [0], [1], [0, 0, 1, 1], [], []>} : vector<8x32xf32>, vector<32x32xf32>, vector<8x32xf32> -> vector<8x32xf32>
    %46 = arith.addf %44, %45 : vector<8x32xf32>
    %47 = math.tanh %46 : vector<8x32xf32>
    %48 = tpu.concatenate %19, %23, %27, %31, %35, %39, %43, %47 in 0 : vector<8x32xf32>, vector<8x32xf32>, vector<8x32xf32>, vector<8x32xf32>, vector<8x32xf32>, vector<8x32xf32>, vector<8x32xf32>, vector<8x32xf32> -> vector<64x32xf32>
    %c0_21 = arith.constant 0 : index
    %c0_22 = arith.constant 0 : index
    %49 = vector.load %arg5[%c0_21, %c0_22] : memref<32x128xf32, #tpu.memory_space<vmem>>, vector<32x128xf32>
    %cst_23 = arith.constant dense<0.000000e+00> : vector<64x128xf32>
    %50 = tpu.matmul %48, %49, %cst_23 {dimension_numbers = #tpu.dot_dimension_numbers<[1], [0], [0], [1], [0, 0, 1, 1], [], []>} : vector<64x32xf32>, vector<32x128xf32>, vector<64x128xf32> -> vector<64x128xf32>
    %c0_24 = arith.constant 0 : index
    %c0_25 = arith.constant 0 : index
    %51 = vector.load %arg6[%c0_24, %c0_25] : memref<1x128xf32, #tpu.memory_space<vmem>>, vector<1x128xf32>
    %52 = vector.broadcast %51 : vector<1x128xf32> to vector<64x128xf32>
    %53 = arith.addf %50, %52 : vector<64x128xf32>
    %c0_26 = arith.constant 0 : index
    %c0_27 = arith.constant 0 : index
    %54 = vector.load %arg7[%c0_26, %c0_27] : memref<64x128xf32, #tpu.memory_space<vmem>>, vector<64x128xf32>
    tpu.vector_store %arg7[%c0_26, %c0_27], %53 {strides = array<i32>} : memref<64x128xf32, #tpu.memory_space<vmem>>, vector<64x128xf32>,
    return
  }
}

</mosaic_0001>

<llo_original>
// kernel: rnn_model_forward.1
$region0: #{rnn_model_forward.1}
  #allocation0 [shape = 'u32[]', space=smem, size = 0x4, offset = 0x4, fixed_abs, tag = 'smem constant byte address 0x4 - core index']
  #allocation1 [shape = 'u32[144,128]{1,0:T(1,128)}', space=vmem, size = 0x12000, scoped, tag = 'internal scratch']
  %s0 = inlined_call_operand.vmem [shape: s32[64,1], index: 0, kind: input, shape index: {}]
  %s1 = inlined_call_operand.vmem [shape: f32[128,128], index: 1, kind: input, shape index: {}]
  %s2 = inlined_call_operand.vmem [shape: f32[128,32], index: 2, kind: input, shape index: {}]
  %s3 = inlined_call_operand.vmem [shape: f32[32,32], index: 3, kind: input, shape index: {}]
  %s4 = inlined_call_operand.vmem [shape: f32[1,32], index: 4, kind: input, shape index: {}]
  %s5 = inlined_call_operand.vmem [shape: f32[32,128], index: 5, kind: input, shape index: {}]
  %s6 = inlined_call_operand.vmem [shape: f32[1,128], index: 6, kind: input, shape index: {}]
  %s7 = inlined_call_operand.vmem [shape: f32[64,128], index: 7, kind: output, shape index: {}]
  %s8 = sld [smem:[#allocation0]]
  $region38: #{rnn_model_forward.1} parent=0
    _
  %s10 = ssub.s32 1, %s8
  %s11 = scalar_select 0, %s10, %s8
  // Predicated region
  $region2: #{rnn_model_forward.1} parent=0 // pred_check
    _
  $region3: #{rnn_model_forward.1} parent=0 // pred_check_branch
    %13 = sbr.rel (0) target = $region5
  $region4: #{rnn_model_forward.1} parent=0 // pred_region
    _
  $region5: #{rnn_model_forward.1} parent=0 // pred_fallthru
    _
  // Predicated region
  $region6: #{rnn_model_forward.1} parent=0 // pred_check
    _
  $region7: #{rnn_model_forward.1} parent=0 // pred_check_branch
    %15 = sbr.rel (0) target = $region9
  $region8: #{rnn_model_forward.1} parent=0 // pred_region
    _
  $region9: #{rnn_model_forward.1} parent=0 // pred_fallthru
    _
  // Predicated region
  $region10: #{rnn_model_forward.1} parent=0 // pred_check
    _
  $region11: #{rnn_model_forward.1} parent=0 // pred_check_branch
    %17 = sbr.rel (0) target = $region13
  $region12: #{rnn_model_forward.1} parent=0 // pred_region
    _
  $region13: #{rnn_model_forward.1} parent=0 // pred_fallthru
    _
  // Predicated region
  $region14: #{rnn_model_forward.1} parent=0 // pred_check
    _
  $region15: #{rnn_model_forward.1} parent=0 // pred_check_branch
    %19 = sbr.rel (0) target = $region17
  $region16: #{rnn_model_forward.1} parent=0 // pred_region
    _
  $region17: #{rnn_model_forward.1} parent=0 // pred_fallthru
    _
  // Predicated region
  $region18: #{rnn_model_forward.1} parent=0 // pred_check
    _
  $region19: #{rnn_model_forward.1} parent=0 // pred_check_branch
    %21 = sbr.rel (0) target = $region21
  $region20: #{rnn_model_forward.1} parent=0 // pred_region
    _
  $region21: #{rnn_model_forward.1} parent=0 // pred_fallthru
    _
  // Predicated region
  $region22: #{rnn_model_forward.1} parent=0 // pred_check
    _
  $region23: #{rnn_model_forward.1} parent=0 // pred_check_branch
    %23 = sbr.rel (0) target = $region25
  $region24: #{rnn_model_forward.1} parent=0 // pred_region
    _
  $region25: #{rnn_model_forward.1} parent=0 // pred_fallthru
    _
  // Predicated region
  $region26: #{rnn_model_forward.1} parent=0 // pred_check
    _
  $region27: #{rnn_model_forward.1} parent=0 // pred_check_branch
    %25 = sbr.rel (0) target = $region29
  $region28: #{rnn_model_forward.1} parent=0 // pred_region
    _
  $region29: #{rnn_model_forward.1} parent=0 // pred_fallthru
    _
  %v26 = vld [vmem:[%s0] sm:$0xff]
  %v27 = vld [vmem:[%s0 + $0x8] sm:$0xff]
  %v28 = vld [vmem:[%s0 + $0x10] sm:$0xff]
  %v29 = vld [vmem:[%s0 + $0x18] sm:$0xff]
  %v30 = vld [vmem:[%s0 + $0x20] sm:$0xff]
  %v31 = vld [vmem:[%s0 + $0x28] sm:$0xff]
  %v32 = vld [vmem:[%s0 + $0x30] sm:$0xff]
  %v33 = vld [vmem:[%s0 + $0x38] sm:$0xff]
  %v34 = vlaneseq
  %v35 = vand.u32 %v34, 127
  %36 = vset.pattern.permute.xlu0 0
  %37 = vperm.xlu0 %36, %v26
  %v38 = vpop.permute.xlu0 %37
  %39 = vset.pattern.permute.xlu0 0
  %40 = vperm.xlu0 %39, %v27
  %v41 = vpop.permute.xlu0 %40
  %42 = vset.pattern.permute.xlu0 0
  %43 = vperm.xlu0 %42, %v28
  %v44 = vpop.permute.xlu0 %43
  %45 = vset.pattern.permute.xlu0 0
  %46 = vperm.xlu0 %45, %v29
  %v47 = vpop.permute.xlu0 %46
  %48 = vset.pattern.permute.xlu0 0
  %49 = vperm.xlu0 %48, %v30
  %v50 = vpop.permute.xlu0 %49
  %51 = vset.pattern.permute.xlu0 0
  %52 = vperm.xlu0 %51, %v31
  %v53 = vpop.permute.xlu0 %52
  %54 = vset.pattern.permute.xlu0 0
  %55 = vperm.xlu0 %54, %v32
  %v56 = vpop.permute.xlu0 %55
  %57 = vset.pattern.permute.xlu0 0
  %58 = vperm.xlu0 %57, %v33
  %v59 = vpop.permute.xlu0 %58
  %vm60 = vcmp.eq.s32.totalorder %v38, %v35
  %vm61 = vcmp.eq.s32.totalorder %v41, %v35
  %vm62 = vcmp.eq.s32.totalorder %v44, %v35
  %vm63 = vcmp.eq.s32.totalorder %v47, %v35
  %vm64 = vcmp.eq.s32.totalorder %v50, %v35
  %vm65 = vcmp.eq.s32.totalorder %v53, %v35
  %vm66 = vcmp.eq.s32.totalorder %v56, %v35
  %vm67 = vcmp.eq.s32.totalorder %v59, %v35
  %v68 = vsel %vm60, 1.0, 0.0
  %v69 = vsel %vm61, 1.0, 0.0
  %v70 = vsel %vm62, 1.0, 0.0
  %v71 = vsel %vm63, 1.0, 0.0
  %v72 = vsel %vm64, 1.0, 0.0
  %v73 = vsel %vm65, 1.0, 0.0
  %v74 = vsel %vm66, 1.0, 0.0
  %v75 = vsel %vm67, 1.0, 0.0
  %v76 = vld [vmem:[%s1] sm:$0xff]
  %v77 = vld [vmem:[%s1 + $0x8] sm:$0xff]
  %v78 = vld [vmem:[%s1 + $0x10] sm:$0xff]
  %v79 = vld [vmem:[%s1 + $0x18] sm:$0xff]
  %v80 = vld [vmem:[%s1 + $0x20] sm:$0xff]
  %v81 = vld [vmem:[%s1 + $0x28] sm:$0xff]
  %v82 = vld [vmem:[%s1 + $0x30] sm:$0xff]
  %v83 = vld [vmem:[%s1 + $0x38] sm:$0xff]
  %v84 = vld [vmem:[%s1 + $0x40] sm:$0xff]
  %v85 = vld [vmem:[%s1 + $0x48] sm:$0xff]
  %v86 = vld [vmem:[%s1 + $0x50] sm:$0xff]
  %v87 = vld [vmem:[%s1 + $0x58] sm:$0xff]
  %v88 = vld [vmem:[%s1 + $0x60] sm:$0xff]
  %v89 = vld [vmem:[%s1 + $0x68] sm:$0xff]
  %v90 = vld [vmem:[%s1 + $0x70] sm:$0xff]
  %v91 = vld [vmem:[%s1 + $0x78] sm:$0xff]
  %92 = vmatprep.subr.mxu0 0.0
  %93 = vmatpush1.msra.mxu0 %v76
  %94 = vmatprep.subr.mxu0 0.0
  %95 = vmatpush1.msra.mxu0 %v77
  %96 = vmatprep.subr.mxu0 0.0
  %97 = vmatpush1.msra.mxu0 %v78
  %98 = vmatprep.subr.mxu0 0.0
  %99 = vmatpush1.msra.mxu0 %v79
  %100 = vmatprep.subr.mxu0 0.0
  %101 = vmatpush1.msra.mxu0 %v80
  %102 = vmatprep.subr.mxu0 0.0
  %103 = vmatpush1.msra.mxu0 %v81
  %104 = vmatprep.subr.mxu0 0.0
  %105 = vmatpush1.msra.mxu0 %v82
  %106 = vmatprep.subr.mxu0 0.0
  %107 = vmatpush1.msra.mxu0 %v83
  %108 = vmatprep.subr.mxu0 0.0
  %109 = vmatpush1.msra.mxu0 %v84
  %110 = vmatprep.subr.mxu0 0.0
  %111 = vmatpush1.msra.mxu0 %v85
  %112 = vmatprep.subr.mxu0 0.0
  %113 = vmatpush1.msra.mxu0 %v86
  %114 = vmatprep.subr.mxu0 0.0
  %115 = vmatpush1.msra.mxu0 %v87
  %116 = vmatprep.subr.mxu0 0.0
  %117 = vmatpush1.msra.mxu0 %v88
  %118 = vmatprep.subr.mxu0 0.0
  %119 = vmatpush1.msra.mxu0 %v89
  %120 = vmatprep.subr.mxu0 0.0
  %121 = vmatpush1.msra.mxu0 %v90
  %122 = vmatprep.subr.mxu0 0.0
  %123 = vmatpush1.msra.mxu0 %v91
  %124 = vmatprep.subr.mxu0 0.0
  %125 = vmatpush1.msra.mxu0 0.0
  %126 = vmatprep.subr.mxu0 0.0
  %127 = vmatpush1.msra.mxu0 0.0
  %128 = vmatprep.subr.mxu0 0.0
  %129 = vmatpush1.msra.mxu0 0.0
  %130 = vmatprep.subr.mxu0 0.0
  %131 = vmatpush1.msra.mxu0 0.0
  %132 = vmatprep.subr.mxu0 0.0
  %133 = vmatpush1.msra.mxu0 0.0
  %134 = vmatprep.subr.mxu0 0.0
  %135 = vmatpush1.msra.mxu0 0.0
  %136 = vmatprep.subr.mxu0 0.0
  %137 = vmatpush1.msra.mxu0 0.0
  %138 = vmatprep.subr.mxu0 0.0
  %139 = vmatpush1.msra.mxu0 0.0
  %140 = vmatprep.subr.mxu0 0.0
  %141 = vmatpush1.msra.mxu0 0.0
  %142 = vmatprep.subr.mxu0 0.0
  %143 = vmatpush1.msra.mxu0 0.0
  %144 = vmatprep.subr.mxu0 0.0
  %145 = vmatpush1.msra.mxu0 0.0
  %146 = vmatprep.subr.mxu0 0.0
  %147 = vmatpush1.msra.mxu0 0.0
  %148 = vmatprep.subr.mxu0 0.0
  %149 = vmatpush1.msra.mxu0 0.0
  %150 = vmatprep.subr.mxu0 0.0
  %151 = vmatpush1.msra.mxu0 0.0
  %152 = vmatprep.subr.mxu0 0.0
  %153 = vmatpush1.msra.mxu0 0.0
  %154 = vmatprep.subr.mxu0 0.0
  %155 = vmatpush1.msra.mxu0 0.0
  %156 = vmatprep.mubr.f32.mxu0 0.0
  %157 = vmatmul.mubr.f32.gmra.mrb[0].mxu0 %v68
  %v158 = vpop.f32.mrb[0].mxu0
  %v159 = vadd.f32 0.0, %v158
  %v160 = vpop.f32.mrb[0].mxu0
  %161 = vmatprep.mubr.f32.mxu0 0.0
  %162 = vmatmul.mubr.f32.gmra.mrb[0].mxu0 %v69
  %v163 = vpop.f32.mrb[0].mxu0
  %v164 = vadd.f32 0.0, %v163
  %v165 = vpop.f32.mrb[0].mxu0
  %166 = vmatprep.mubr.f32.mxu0 0.0
  %167 = vmatmul.mubr.f32.gmra.mrb[0].mxu0 %v70
  %v168 = vpop.f32.mrb[0].mxu0
  %v169 = vadd.f32 0.0, %v168
  %v170 = vpop.f32.mrb[0].mxu0
  %171 = vmatprep.mubr.f32.mxu0 0.0
  %172 = vmatmul.mubr.f32.gmra.mrb[0].mxu0 %v71
  %v173 = vpop.f32.mrb[0].mxu0
  %v174 = vadd.f32 0.0, %v173
  %v175 = vpop.f32.mrb[0].mxu0
  %176 = vmatprep.mubr.f32.mxu0 0.0
  %177 = vmatmul.mubr.f32.gmra.mrb[0].mxu0 %v72
  %v178 = vpop.f32.mrb[0].mxu0
  %v179 = vadd.f32 0.0, %v178
  %v180 = vpop.f32.mrb[0].mxu0
  %181 = vmatprep.mubr.f32.mxu0 0.0
  %182 = vmatmul.mubr.f32.gmra.mrb[0].mxu0 %v73
  %v183 = vpop.f32.mrb[0].mxu0
  %v184 = vadd.f32 0.0, %v183
  %v185 = vpop.f32.mrb[0].mxu0
  %186 = vmatprep.mubr.f32.mxu0 0.0
  %187 = vmatmul.mubr.f32.gmra.mrb[0].mxu0 %v74
  %v188 = vpop.f32.mrb[0].mxu0
  %v189 = vadd.f32 0.0, %v188
  %v190 = vpop.f32.mrb[0].mxu0
  %191 = vmatprep.mubr.f32.mxu0 0.0
  %192 = vmatmul.mubr.f32.gmra.mrb[0].mxu0 %v75
  %v193 = vpop.f32.mrb[0].mxu0
  %v194 = vadd.f32 0.0, %v193
  %v195 = vpop.f32.mrb[0].mxu0
  %196 = vdwg.mxu0
  %v197 = vld [vmem:[%s2] sm:$0xff]
  %v198 = vld [vmem:[%s2 + $0x8] sm:$0xff]
  %v199 = vld [vmem:[%s2 + $0x10] sm:$0xff]
  %v200 = vld [vmem:[%s2 + $0x18] sm:$0xff]
  %v201 = vld [vmem:[%s2 + $0x20] sm:$0xff]
  %v202 = vld [vmem:[%s2 + $0x28] sm:$0xff]
  %v203 = vld [vmem:[%s2 + $0x30] sm:$0xff]
  %v204 = vld [vmem:[%s2 + $0x38] sm:$0xff]
  %v205 = vld [vmem:[%s2 + $0x40] sm:$0xff]
  %v206 = vld [vmem:[%s2 + $0x48] sm:$0xff]
  %v207 = vld [vmem:[%s2 + $0x50] sm:$0xff]
  %v208 = vld [vmem:[%s2 + $0x58] sm:$0xff]
  %v209 = vld [vmem:[%s2 + $0x60] sm:$0xff]
  %v210 = vld [vmem:[%s2 + $0x68] sm:$0xff]
  %v211 = vld [vmem:[%s2 + $0x70] sm:$0xff]
  %v212 = vld [vmem:[%s2 + $0x78] sm:$0xff]
  %v213 = vld [vmem:[%s4] sm:$0x1]
  %v215 = vlaneseq
  %v216 = vshrl.u32 %v215, 7
  %v217 = vsub.s32 0, %v216
  %v218 = vrot.slane %v213, %v217
  %220 = vmatprep.subr.mxu0 0.0
  %221 = vmatpush1.msra.mxu0 %v197
  %222 = vmatprep.subr.mxu0 0.0
  %223 = vmatpush1.msra.mxu0 %v198
  %224 = vmatprep.subr.mxu0 0.0
  %225 = vmatpush1.msra.mxu0 %v199
  %226 = vmatprep.subr.mxu0 0.0
  %227 = vmatpush1.msra.mxu0 %v200
  %228 = vmatprep.subr.mxu0 0.0
  %229 = vmatpush1.msra.mxu0 %v201
  %230 = vmatprep.subr.mxu0 0.0
  %231 = vmatpush1.msra.mxu0 %v202
  %232 = vmatprep.subr.mxu0 0.0
  %233 = vmatpush1.msra.mxu0 %v203
  %234 = vmatprep.subr.mxu0 0.0
  %235 = vmatpush1.msra.mxu0 %v204
  %236 = vmatprep.subr.mxu0 0.0
  %237 = vmatpush1.msra.mxu0 %v205
  %238 = vmatprep.subr.mxu0 0.0
  %239 = vmatpush1.msra.mxu0 %v206
  %240 = vmatprep.subr.mxu0 0.0
  %241 = vmatpush1.msra.mxu0 %v207
  %242 = vmatprep.subr.mxu0 0.0
  %243 = vmatpush1.msra.mxu0 %v208
  %244 = vmatprep.subr.mxu0 0.0
  %245 = vmatpush1.msra.mxu0 %v209
  %246 = vmatprep.subr.mxu0 0.0
  %247 = vmatpush1.msra.mxu0 %v210
  %248 = vmatprep.subr.mxu0 0.0
  %249 = vmatpush1.msra.mxu0 %v211
  %250 = vmatprep.subr.mxu0 0.0
  %251 = vmatpush1.msra.mxu0 %v212
  %252 = vmatprep.subr.mxu0 0.0
  %253 = vmatpush1.msra.mxu0 0.0
  %254 = vmatprep.subr.mxu0 0.0
  %255 = vmatpush1.msra.mxu0 0.0
  %256 = vmatprep.subr.mxu0 0.0
  %257 = vmatpush1.msra.mxu0 0.0
  %258 = vmatprep.subr.mxu0 0.0
  %259 = vmatpush1.msra.mxu0 0.0
  %260 = vmatprep.subr.mxu0 0.0
  %261 = vmatpush1.msra.mxu0 0.0
  %262 = vmatprep.subr.mxu0 0.0
  %263 = vmatpush1.msra.mxu0 0.0
  %264 = vmatprep.subr.mxu0 0.0
  %265 = vmatpush1.msra.mxu0 0.0
  %266 = vmatprep.subr.mxu0 0.0
  %267 = vmatpush1.msra.mxu0 0.0
  %268 = vmatprep.subr.mxu0 0.0
  %269 = vmatpush1.msra.mxu0 0.0
  %270 = vmatprep.subr.mxu0 0.0
  %271 = vmatpush1.msra.mxu0 0.0
  %272 = vmatprep.subr.mxu0 0.0
  %273 = vmatpush1.msra.mxu0 0.0
  %274 = vmatprep.subr.mxu0 0.0
  %275 = vmatpush1.msra.mxu0 0.0
  %276 = vmatprep.subr.mxu0 0.0
  %277 = vmatpush1.msra.mxu0 0.0
  %278 = vmatprep.subr.mxu0 0.0
  %279 = vmatpush1.msra.mxu0 0.0
  %280 = vmatprep.subr.mxu0 0.0
  %281 = vmatpush1.msra.mxu0 0.0
  %282 = vmatprep.subr.mxu0 0.0
  %283 = vmatpush1.msra.mxu0 0.0
  %284 = vmatprep.mubr.f32.mxu0 0.0
  %285 = vmatmul.mubr.f32.gmra.mrb[0].mxu0 %v159
  %v286 = vpop.f32.mrb[0].mxu0
  %v287 = vadd.f32 %v218, %v286
  %v288 = vpop.f32.mrb[0].mxu0
  %289 = vmatprep.mubr.f32.mxu0 0.0
  %290 = vmatmul.mubr.f32.gmra.mrb[0].mxu0 %v164
  %v291 = vpop.f32.mrb[0].mxu0
  %v292 = vadd.f32 %v218, %v291
  %v293 = vpop.f32.mrb[0].mxu0
  %294 = vmatprep.mubr.f32.mxu0 0.0
  %295 = vmatmul.mubr.f32.gmra.mrb[0].mxu0 %v169
  %v296 = vpop.f32.mrb[0].mxu0
  %v297 = vadd.f32 %v218, %v296
  %v298 = vpop.f32.mrb[0].mxu0
  %299 = vmatprep.mubr.f32.mxu0 0.0
  %300 = vmatmul.mubr.f32.gmra.mrb[0].mxu0 %v174
  %v301 = vpop.f32.mrb[0].mxu0
  %v302 = vadd.f32 %v218, %v301
  %v303 = vpop.f32.mrb[0].mxu0
  %304 = vmatprep.mubr.f32.mxu0 0.0
  %305 = vmatmul.mubr.f32.gmra.mrb[0].mxu0 %v179
  %v306 = vpop.f32.mrb[0].mxu0
  %v307 = vadd.f32 %v218, %v306
  %v308 = vpop.f32.mrb[0].mxu0
  %309 = vmatprep.mubr.f32.mxu0 0.0
  %310 = vmatmul.mubr.f32.gmra.mrb[0].mxu0 %v184
  %v311 = vpop.f32.mrb[0].mxu0
  %v312 = vadd.f32 %v218, %v311
  %v313 = vpop.f32.mrb[0].mxu0
  %314 = vmatprep.mubr.f32.mxu0 0.0
  %315 = vmatmul.mubr.f32.gmra.mrb[0].mxu0 %v189
  %v316 = vpop.f32.mrb[0].mxu0
  %v317 = vadd.f32 %v218, %v316
  %v318 = vpop.f32.mrb[0].mxu0
  %319 = vmatprep.mubr.f32.mxu0 0.0
  %320 = vmatmul.mubr.f32.gmra.mrb[0].mxu0 %v194
  %v321 = vpop.f32.mrb[0].mxu0
  %v322 = vadd.f32 %v218, %v321
  %v323 = vpop.f32.mrb[0].mxu0
  %324 = vdwg.mxu0
  %v325 = vld [vmem:[%s3] sm:$0xff]
  %v326 = vld [vmem:[%s3 + $0x8] sm:$0xff]
  %v327 = vld [vmem:[%s3 + $0x10] sm:$0xff]
  %v328 = vld [vmem:[%s3 + $0x18] sm:$0xff]
  %vm329 = vcmask 261120
  %v331 = vsel %vm329, 0.0, 0
  %333 = vmatprep.subr.mxu0 0.0
  %334 = vmatpush1.msra.mxu0 %v325
  %335 = vmatprep.subr.mxu0 0.0
  %336 = vmatpush1.msra.mxu0 %v326
  %337 = vmatprep.subr.mxu0 0.0
  %338 = vmatpush1.msra.mxu0 %v327
  %339 = vmatprep.subr.mxu0 0.0
  %340 = vmatpush1.msra.mxu0 %v328
  %341 = vmatprep.subr.mxu0 0.0
  %342 = vmatpush1.msra.mxu0 0.0
  %343 = vmatprep.subr.mxu0 0.0
  %344 = vmatpush1.msra.mxu0 0.0
  %345 = vmatprep.subr.mxu0 0.0
  %346 = vmatpush1.msra.mxu0 0.0
  %347 = vmatprep.subr.mxu0 0.0
  %348 = vmatpush1.msra.mxu0 0.0
  %349 = vmatprep.subr.mxu0 0.0
  %350 = vmatpush1.msra.mxu0 0.0
  %351 = vmatprep.subr.mxu0 0.0
  %352 = vmatpush1.msra.mxu0 0.0
  %353 = vmatprep.subr.mxu0 0.0
  %354 = vmatpush1.msra.mxu0 0.0
  %355 = vmatprep.subr.mxu0 0.0
  %356 = vmatpush1.msra.mxu0 0.0
  %357 = vmatprep.subr.mxu0 0.0
  %358 = vmatpush1.msra.mxu0 0.0
  %359 = vmatprep.subr.mxu0 0.0
  %360 = vmatpush1.msra.mxu0 0.0
  %361 = vmatprep.subr.mxu0 0.0
  %362 = vmatpush1.msra.mxu0 0.0
  %363 = vmatprep.subr.mxu0 0.0
  %364 = vmatpush1.msra.mxu0 0.0
  %365 = vmatprep.subr.mxu0 0.0
  %366 = vmatpush1.msra.mxu0 0.0
  %367 = vmatprep.subr.mxu0 0.0
  %368 = vmatpush1.msra.mxu0 0.0
  %369 = vmatprep.subr.mxu0 0.0
  %370 = vmatpush1.msra.mxu0 0.0
  %371 = vmatprep.subr.mxu0 0.0
  %372 = vmatpush1.msra.mxu0 0.0
  %373 = vmatprep.subr.mxu0 0.0
  %374 = vmatpush1.msra.mxu0 0.0
  %375 = vmatprep.subr.mxu0 0.0
  %376 = vmatpush1.msra.mxu0 0.0
  %377 = vmatprep.subr.mxu0 0.0
  %378 = vmatpush1.msra.mxu0 0.0
  %379 = vmatprep.subr.mxu0 0.0
  %380 = vmatpush1.msra.mxu0 0.0
  %381 = vmatprep.subr.mxu0 0.0
  %382 = vmatpush1.msra.mxu0 0.0
  %383 = vmatprep.subr.mxu0 0.0
  %384 = vmatpush1.msra.mxu0 0.0
  %385 = vmatprep.subr.mxu0 0.0
  %386 = vmatpush1.msra.mxu0 0.0
  %387 = vmatprep.subr.mxu0 0.0
  %388 = vmatpush1.msra.mxu0 0.0
  %389 = vmatprep.subr.mxu0 0.0
  %390 = vmatpush1.msra.mxu0 0.0
  %391 = vmatprep.subr.mxu0 0.0
  %392 = vmatpush1.msra.mxu0 0.0
  %393 = vmatprep.subr.mxu0 0.0
  %394 = vmatpush1.msra.mxu0 0.0
  %395 = vmatprep.subr.mxu0 0.0
  %396 = vmatpush1.msra.mxu0 0.0
  %397 = vmatprep.mubr.f32.mxu0 0.0
  %398 = vmatmul.mubr.f32.gmra.mrb[0].mxu0 %v331
  %v399 = vpop.f32.mrb[0].mxu0
  %v400 = vadd.f32 0.0, %v399
  %v401 = vpop.f32.mrb[0].mxu0
  %402 = vdwg.mxu0
  %v403 = vadd.f32 %v287, %v400
  %v404 = vtanh.pop %v403
  %v406 = vsel %vm329, %v404, 0
  %408 = vmatprep.subr.mxu0 0.0
  %409 = vmatpush1.msra.mxu0 %v325
  %410 = vmatprep.subr.mxu0 0.0
  %411 = vmatpush1.msra.mxu0 %v326
  %412 = vmatprep.subr.mxu0 0.0
  %413 = vmatpush1.msra.mxu0 %v327
  %414 = vmatprep.subr.mxu0 0.0
  %415 = vmatpush1.msra.mxu0 %v328
  %416 = vmatprep.subr.mxu0 0.0
  %417 = vmatpush1.msra.mxu0 0.0
  %418 = vmatprep.subr.mxu0 0.0
  %419 = vmatpush1.msra.mxu0 0.0
  %420 = vmatprep.subr.mxu0 0.0
  %421 = vmatpush1.msra.mxu0 0.0
  %422 = vmatprep.subr.mxu0 0.0
  %423 = vmatpush1.msra.mxu0 0.0
  %424 = vmatprep.subr.mxu0 0.0
  %425 = vmatpush1.msra.mxu0 0.0
  %426 = vmatprep.subr.mxu0 0.0
  %427 = vmatpush1.msra.mxu0 0.0
  %428 = vmatprep.subr.mxu0 0.0
  %429 = vmatpush1.msra.mxu0 0.0
  %430 = vmatprep.subr.mxu0 0.0
  %431 = vmatpush1.msra.mxu0 0.0
  %432 = vmatprep.subr.mxu0 0.0
  %433 = vmatpush1.msra.mxu0 0.0
  %434 = vmatprep.subr.mxu0 0.0
  %435 = vmatpush1.msra.mxu0 0.0
  %436 = vmatprep.subr.mxu0 0.0
  %437 = vmatpush1.msra.mxu0 0.0
  %438 = vmatprep.subr.mxu0 0.0
  %439 = vmatpush1.msra.mxu0 0.0
  %440 = vmatprep.subr.mxu0 0.0
  %441 = vmatpush1.msra.mxu0 0.0
  %442 = vmatprep.subr.mxu0 0.0
  %443 = vmatpush1.msra.mxu0 0.0
  %444 = vmatprep.subr.mxu0 0.0
  %445 = vmatpush1.msra.mxu0 0.0
  %446 = vmatprep.subr.mxu0 0.0
  %447 = vmatpush1.msra.mxu0 0.0
  %448 = vmatprep.subr.mxu0 0.0
  %449 = vmatpush1.msra.mxu0 0.0
  %450 = vmatprep.subr.mxu0 0.0
  %451 = vmatpush1.msra.mxu0 0.0
  %452 = vmatprep.subr.mxu0 0.0
  %453 = vmatpush1.msra.mxu0 0.0
  %454 = vmatprep.subr.mxu0 0.0
  %455 = vmatpush1.msra.mxu0 0.0
  %456 = vmatprep.subr.mxu0 0.0
  %457 = vmatpush1.msra.mxu0 0.0
  %458 = vmatprep.subr.mxu0 0.0
  %459 = vmatpush1.msra.mxu0 0.0
  %460 = vmatprep.subr.mxu0 0.0
  %461 = vmatpush1.msra.mxu0 0.0
  %462 = vmatprep.subr.mxu0 0.0
  %463 = vmatpush1.msra.mxu0 0.0
  %464 = vmatprep.subr.mxu0 0.0
  %465 = vmatpush1.msra.mxu0 0.0
  %466 = vmatprep.subr.mxu0 0.0
  %467 = vmatpush1.msra.mxu0 0.0
  %468 = vmatprep.subr.mxu0 0.0
  %469 = vmatpush1.msra.mxu0 0.0
  %470 = vmatprep.subr.mxu0 0.0
  %471 = vmatpush1.msra.mxu0 0.0
  %472 = vmatprep.mubr.f32.mxu0 0.0
  %473 = vmatmul.mubr.f32.gmra.mrb[0].mxu0 %v406
  %v474 = vpop.f32.mrb[0].mxu0
  %v475 = vadd.f32 0.0, %v474
  %v476 = vpop.f32.mrb[0].mxu0
  %477 = vdwg.mxu0
  %v478 = vadd.f32 %v292, %v475
  %v479 = vtanh.pop %v478
  %v481 = vsel %vm329, %v479, 0
  %483 = vmatprep.subr.mxu0 0.0
  %484 = vmatpush1.msra.mxu0 %v325
  %485 = vmatprep.subr.mxu0 0.0
  %486 = vmatpush1.msra.mxu0 %v326
  %487 = vmatprep.subr.mxu0 0.0
  %488 = vmatpush1.msra.mxu0 %v327
  %489 = vmatprep.subr.mxu0 0.0
  %490 = vmatpush1.msra.mxu0 %v328
  %491 = vmatprep.subr.mxu0 0.0
  %492 = vmatpush1.msra.mxu0 0.0
  %493 = vmatprep.subr.mxu0 0.0
  %494 = vmatpush1.msra.mxu0 0.0
  %495 = vmatprep.subr.mxu0 0.0
  %496 = vmatpush1.msra.mxu0 0.0
  %497 = vmatprep.subr.mxu0 0.0
  %498 = vmatpush1.msra.mxu0 0.0
  %499 = vmatprep.subr.mxu0 0.0
  %500 = vmatpush1.msra.mxu0 0.0
  %501 = vmatprep.subr.mxu0 0.0
  %502 = vmatpush1.msra.mxu0 0.0
  %503 = vmatprep.subr.mxu0 0.0
  %504 = vmatpush1.msra.mxu0 0.0
  %505 = vmatprep.subr.mxu0 0.0
  %506 = vmatpush1.msra.mxu0 0.0
  %507 = vmatprep.subr.mxu0 0.0
  %508 = vmatpush1.msra.mxu0 0.0
  %509 = vmatprep.subr.mxu0 0.0
  %510 = vmatpush1.msra.mxu0 0.0
  %511 = vmatprep.subr.mxu0 0.0
  %512 = vmatpush1.msra.mxu0 0.0
  %513 = vmatprep.subr.mxu0 0.0
  %514 = vmatpush1.msra.mxu0 0.0
  %515 = vmatprep.subr.mxu0 0.0
  %516 = vmatpush1.msra.mxu0 0.0
  %517 = vmatprep.subr.mxu0 0.0
  %518 = vmatpush1.msra.mxu0 0.0
  %519 = vmatprep.subr.mxu0 0.0
  %520 = vmatpush1.msra.mxu0 0.0
  %521 = vmatprep.subr.mxu0 0.0
  %522 = vmatpush1.msra.mxu0 0.0
  %523 = vmatprep.subr.mxu0 0.0
  %524 = vmatpush1.msra.mxu0 0.0
  %525 = vmatprep.subr.mxu0 0.0
  %526 = vmatpush1.msra.mxu0 0.0
  %527 = vmatprep.subr.mxu0 0.0
  %528 = vmatpush1.msra.mxu0 0.0
  %529 = vmatprep.subr.mxu0 0.0
  %530 = vmatpush1.msra.mxu0 0.0
  %531 = vmatprep.subr.mxu0 0.0
  %532 = vmatpush1.msra.mxu0 0.0
  %533 = vmatprep.subr.mxu0 0.0
  %534 = vmatpush1.msra.mxu0 0.0
  %535 = vmatprep.subr.mxu0 0.0
  %536 = vmatpush1.msra.mxu0 0.0
  %537 = vmatprep.subr.mxu0 0.0
  %538 = vmatpush1.msra.mxu0 0.0
  %539 = vmatprep.subr.mxu0 0.0
  %540 = vmatpush1.msra.mxu0 0.0
  %541 = vmatprep.subr.mxu0 0.0
  %542 = vmatpush1.msra.mxu0 0.0
  %543 = vmatprep.subr.mxu0 0.0
  %544 = vmatpush1.msra.mxu0 0.0
  %545 = vmatprep.subr.mxu0 0.0
  %546 = vmatpush1.msra.mxu0 0.0
  %547 = vmatprep.mubr.f32.mxu0 0.0
  %548 = vmatmul.mubr.f32.gmra.mrb[0].mxu0 %v481
  %v549 = vpop.f32.mrb[0].mxu0
  %v550 = vadd.f32 0.0, %v549
  %v551 = vpop.f32.mrb[0].mxu0
  %552 = vdwg.mxu0
  %v553 = vadd.f32 %v297, %v550
  %v554 = vtanh.pop %v553
  %v556 = vsel %vm329, %v554, 0
  %558 = vmatprep.subr.mxu0 0.0
  %559 = vmatpush1.msra.mxu0 %v325
  %560 = vmatprep.subr.mxu0 0.0
  %561 = vmatpush1.msra.mxu0 %v326
  %562 = vmatprep.subr.mxu0 0.0
  %563 = vmatpush1.msra.mxu0 %v327
  %564 = vmatprep.subr.mxu0 0.0
  %565 = vmatpush1.msra.mxu0 %v328
  %566 = vmatprep.subr.mxu0 0.0
  %567 = vmatpush1.msra.mxu0 0.0
  %568 = vmatprep.subr.mxu0 0.0
  %569 = vmatpush1.msra.mxu0 0.0
  %570 = vmatprep.subr.mxu0 0.0
  %571 = vmatpush1.msra.mxu0 0.0
  %572 = vmatprep.subr.mxu0 0.0
  %573 = vmatpush1.msra.mxu0 0.0
  %574 = vmatprep.subr.mxu0 0.0
  %575 = vmatpush1.msra.mxu0 0.0
  %576 = vmatprep.subr.mxu0 0.0
  %577 = vmatpush1.msra.mxu0 0.0
  %578 = vmatprep.subr.mxu0 0.0
  %579 = vmatpush1.msra.mxu0 0.0
  %580 = vmatprep.subr.mxu0 0.0
  %581 = vmatpush1.msra.mxu0 0.0
  %582 = vmatprep.subr.mxu0 0.0
  %583 = vmatpush1.msra.mxu0 0.0
  %584 = vmatprep.subr.mxu0 0.0
  %585 = vmatpush1.msra.mxu0 0.0
  %586 = vmatprep.subr.mxu0 0.0
  %587 = vmatpush1.msra.mxu0 0.0
  %588 = vmatprep.subr.mxu0 0.0
  %589 = vmatpush1.msra.mxu0 0.0
  %590 = vmatprep.subr.mxu0 0.0
  %591 = vmatpush1.msra.mxu0 0.0
  %592 = vmatprep.subr.mxu0 0.0
  %593 = vmatpush1.msra.mxu0 0.0
  %594 = vmatprep.subr.mxu0 0.0
  %595 = vmatpush1.msra.mxu0 0.0
  %596 = vmatprep.subr.mxu0 0.0
  %597 = vmatpush1.msra.mxu0 0.0
  %598 = vmatprep.subr.mxu0 0.0
  %599 = vmatpush1.msra.mxu0 0.0
  %600 = vmatprep.subr.mxu0 0.0
  %601 = vmatpush1.msra.mxu0 0.0
  %602 = vmatprep.subr.mxu0 0.0
  %603 = vmatpush1.msra.mxu0 0.0
  %604 = vmatprep.subr.mxu0 0.0
  %605 = vmatpush1.msra.mxu0 0.0
  %606 = vmatprep.subr.mxu0 0.0
  %607 = vmatpush1.msra.mxu0 0.0
  %608 = vmatprep.subr.mxu0 0.0
  %609 = vmatpush1.msra.mxu0 0.0
  %610 = vmatprep.subr.mxu0 0.0
  %611 = vmatpush1.msra.mxu0 0.0
  %612 = vmatprep.subr.mxu0 0.0
  %613 = vmatpush1.msra.mxu0 0.0
  %614 = vmatprep.subr.mxu0 0.0
  %615 = vmatpush1.msra.mxu0 0.0
  %616 = vmatprep.subr.mxu0 0.0
  %617 = vmatpush1.msra.mxu0 0.0
  %618 = vmatprep.subr.mxu0 0.0
  %619 = vmatpush1.msra.mxu0 0.0
  %620 = vmatprep.subr.mxu0 0.0
  %621 = vmatpush1.msra.mxu0 0.0
  %622 = vmatprep.mubr.f32.mxu0 0.0
  %623 = vmatmul.mubr.f32.gmra.mrb[0].mxu0 %v556
  %v624 = vpop.f32.mrb[0].mxu0
  %v625 = vadd.f32 0.0, %v624
  %v626 = vpop.f32.mrb[0].mxu0
  %627 = vdwg.mxu0
  %v628 = vadd.f32 %v302, %v625
  %v629 = vtanh.pop %v628
  %v631 = vsel %vm329, %v629, 0
  %633 = vmatprep.subr.mxu0 0.0
  %634 = vmatpush1.msra.mxu0 %v325
  %635 = vmatprep.subr.mxu0 0.0
  %636 = vmatpush1.msra.mxu0 %v326
  %637 = vmatprep.subr.mxu0 0.0
  %638 = vmatpush1.msra.mxu0 %v327
  %639 = vmatprep.subr.mxu0 0.0
  %640 = vmatpush1.msra.mxu0 %v328
  %641 = vmatprep.subr.mxu0 0.0
  %642 = vmatpush1.msra.mxu0 0.0
  %643 = vmatprep.subr.mxu0 0.0
  %644 = vmatpush1.msra.mxu0 0.0
  %645 = vmatprep.subr.mxu0 0.0
  %646 = vmatpush1.msra.mxu0 0.0
  %647 = vmatprep.subr.mxu0 0.0
  %648 = vmatpush1.msra.mxu0 0.0
  %649 = vmatprep.subr.mxu0 0.0
  %650 = vmatpush1.msra.mxu0 0.0
  %651 = vmatprep.subr.mxu0 0.0
  %652 = vmatpush1.msra.mxu0 0.0
  %653 = vmatprep.subr.mxu0 0.0
  %654 = vmatpush1.msra.mxu0 0.0
  %655 = vmatprep.subr.mxu0 0.0
  %656 = vmatpush1.msra.mxu0 0.0
  %657 = vmatprep.subr.mxu0 0.0
  %658 = vmatpush1.msra.mxu0 0.0
  %659 = vmatprep.subr.mxu0 0.0
  %660 = vmatpush1.msra.mxu0 0.0
  %661 = vmatprep.subr.mxu0 0.0
  %662 = vmatpush1.msra.mxu0 0.0
  %663 = vmatprep.subr.mxu0 0.0
  %664 = vmatpush1.msra.mxu0 0.0
  %665 = vmatprep.subr.mxu0 0.0
  %666 = vmatpush1.msra.mxu0 0.0
  %667 = vmatprep.subr.mxu0 0.0
  %668 = vmatpush1.msra.mxu0 0.0
  %669 = vmatprep.subr.mxu0 0.0
  %670 = vmatpush1.msra.mxu0 0.0
  %671 = vmatprep.subr.mxu0 0.0
  %672 = vmatpush1.msra.mxu0 0.0
  %673 = vmatprep.subr.mxu0 0.0
  %674 = vmatpush1.msra.mxu0 0.0
  %675 = vmatprep.subr.mxu0 0.0
  %676 = vmatpush1.msra.mxu0 0.0
  %677 = vmatprep.subr.mxu0 0.0
  %678 = vmatpush1.msra.mxu0 0.0
  %679 = vmatprep.subr.mxu0 0.0
  %680 = vmatpush1.msra.mxu0 0.0
  %681 = vmatprep.subr.mxu0 0.0
  %682 = vmatpush1.msra.mxu0 0.0
  %683 = vmatprep.subr.mxu0 0.0
  %684 = vmatpush1.msra.mxu0 0.0
  %685 = vmatprep.subr.mxu0 0.0
  %686 = vmatpush1.msra.mxu0 0.0
  %687 = vmatprep.subr.mxu0 0.0
  %688 = vmatpush1.msra.mxu0 0.0
  %689 = vmatprep.subr.mxu0 0.0
  %690 = vmatpush1.msra.mxu0 0.0
  %691 = vmatprep.subr.mxu0 0.0
  %692 = vmatpush1.msra.mxu0 0.0
  %693 = vmatprep.subr.mxu0 0.0
  %694 = vmatpush1.msra.mxu0 0.0
  %695 = vmatprep.subr.mxu0 0.0
  %696 = vmatpush1.msra.mxu0 0.0
  %697 = vmatprep.mubr.f32.mxu0 0.0
  %698 = vmatmul.mubr.f32.gmra.mrb[0].mxu0 %v631
  %v699 = vpop.f32.mrb[0].mxu0
  %v700 = vadd.f32 0.0, %v699
  %v701 = vpop.f32.mrb[0].mxu0
  %702 = vdwg.mxu0
  %v703 = vadd.f32 %v307, %v700
  %v704 = vtanh.pop %v703
  %v706 = vsel %vm329, %v704, 0
  %708 = vmatprep.subr.mxu0 0.0
  %709 = vmatpush1.msra.mxu0 %v325
  %710 = vmatprep.subr.mxu0 0.0
  %711 = vmatpush1.msra.mxu0 %v326
  %712 = vmatprep.subr.mxu0 0.0
  %713 = vmatpush1.msra.mxu0 %v327
  %714 = vmatprep.subr.mxu0 0.0
  %715 = vmatpush1.msra.mxu0 %v328
  %716 = vmatprep.subr.mxu0 0.0
  %717 = vmatpush1.msra.mxu0 0.0
  %718 = vmatprep.subr.mxu0 0.0
  %719 = vmatpush1.msra.mxu0 0.0
  %720 = vmatprep.subr.mxu0 0.0
  %721 = vmatpush1.msra.mxu0 0.0
  %722 = vmatprep.subr.mxu0 0.0
  %723 = vmatpush1.msra.mxu0 0.0
  %724 = vmatprep.subr.mxu0 0.0
  %725 = vmatpush1.msra.mxu0 0.0
  %726 = vmatprep.subr.mxu0 0.0
  %727 = vmatpush1.msra.mxu0 0.0
  %728 = vmatprep.subr.mxu0 0.0
  %729 = vmatpush1.msra.mxu0 0.0
  %730 = vmatprep.subr.mxu0 0.0
  %731 = vmatpush1.msra.mxu0 0.0
  %732 = vmatprep.subr.mxu0 0.0
  %733 = vmatpush1.msra.mxu0 0.0
  %734 = vmatprep.subr.mxu0 0.0
  %735 = vmatpush1.msra.mxu0 0.0
  %736 = vmatprep.subr.mxu0 0.0
  %737 = vmatpush1.msra.mxu0 0.0
  %738 = vmatprep.subr.mxu0 0.0
  %739 = vmatpush1.msra.mxu0 0.0
  %740 = vmatprep.subr.mxu0 0.0
  %741 = vmatpush1.msra.mxu0 0.0
  %742 = vmatprep.subr.mxu0 0.0
  %743 = vmatpush1.msra.mxu0 0.0
  %744 = vmatprep.subr.mxu0 0.0
  %745 = vmatpush1.msra.mxu0 0.0
  %746 = vmatprep.subr.mxu0 0.0
  %747 = vmatpush1.msra.mxu0 0.0
  %748 = vmatprep.subr.mxu0 0.0
  %749 = vmatpush1.msra.mxu0 0.0
  %750 = vmatprep.subr.mxu0 0.0
  %751 = vmatpush1.msra.mxu0 0.0
  %752 = vmatprep.subr.mxu0 0.0
  %753 = vmatpush1.msra.mxu0 0.0
  %754 = vmatprep.subr.mxu0 0.0
  %755 = vmatpush1.msra.mxu0 0.0
  %756 = vmatprep.subr.mxu0 0.0
  %757 = vmatpush1.msra.mxu0 0.0
  %758 = vmatprep.subr.mxu0 0.0
  %759 = vmatpush1.msra.mxu0 0.0
  %760 = vmatprep.subr.mxu0 0.0
  %761 = vmatpush1.msra.mxu0 0.0
  %762 = vmatprep.subr.mxu0 0.0
  %763 = vmatpush1.msra.mxu0 0.0
  %764 = vmatprep.subr.mxu0 0.0
  %765 = vmatpush1.msra.mxu0 0.0
  %766 = vmatprep.subr.mxu0 0.0
  %767 = vmatpush1.msra.mxu0 0.0
  %768 = vmatprep.subr.mxu0 0.0
  %769 = vmatpush1.msra.mxu0 0.0
  %770 = vmatprep.subr.mxu0 0.0
  %771 = vmatpush1.msra.mxu0 0.0
  %772 = vmatprep.mubr.f32.mxu0 0.0
  %773 = vmatmul.mubr.f32.gmra.mrb[0].mxu0 %v706
  %v774 = vpop.f32.mrb[0].mxu0
  %v775 = vadd.f32 0.0, %v774
  %v776 = vpop.f32.mrb[0].mxu0
  %777 = vdwg.mxu0
  %v778 = vadd.f32 %v312, %v775
  %v779 = vtanh.pop %v778
  %v781 = vsel %vm329, %v779, 0
  %783 = vmatprep.subr.mxu0 0.0
  %784 = vmatpush1.msra.mxu0 %v325
  %785 = vmatprep.subr.mxu0 0.0
  %786 = vmatpush1.msra.mxu0 %v326
  %787 = vmatprep.subr.mxu0 0.0
  %788 = vmatpush1.msra.mxu0 %v327
  %789 = vmatprep.subr.mxu0 0.0
  %790 = vmatpush1.msra.mxu0 %v328
  %791 = vmatprep.subr.mxu0 0.0
  %792 = vmatpush1.msra.mxu0 0.0
  %793 = vmatprep.subr.mxu0 0.0
  %794 = vmatpush1.msra.mxu0 0.0
  %795 = vmatprep.subr.mxu0 0.0
  %796 = vmatpush1.msra.mxu0 0.0
  %797 = vmatprep.subr.mxu0 0.0
  %798 = vmatpush1.msra.mxu0 0.0
  %799 = vmatprep.subr.mxu0 0.0
  %800 = vmatpush1.msra.mxu0 0.0
  %801 = vmatprep.subr.mxu0 0.0
  %802 = vmatpush1.msra.mxu0 0.0
  %803 = vmatprep.subr.mxu0 0.0
  %804 = vmatpush1.msra.mxu0 0.0
  %805 = vmatprep.subr.mxu0 0.0
  %806 = vmatpush1.msra.mxu0 0.0
  %807 = vmatprep.subr.mxu0 0.0
  %808 = vmatpush1.msra.mxu0 0.0
  %809 = vmatprep.subr.mxu0 0.0
  %810 = vmatpush1.msra.mxu0 0.0
  %811 = vmatprep.subr.mxu0 0.0
  %812 = vmatpush1.msra.mxu0 0.0
  %813 = vmatprep.subr.mxu0 0.0
  %814 = vmatpush1.msra.mxu0 0.0
  %815 = vmatprep.subr.mxu0 0.0
  %816 = vmatpush1.msra.mxu0 0.0
  %817 = vmatprep.subr.mxu0 0.0
  %818 = vmatpush1.msra.mxu0 0.0
  %819 = vmatprep.subr.mxu0 0.0
  %820 = vmatpush1.msra.mxu0 0.0
  %821 = vmatprep.subr.mxu0 0.0
  %822 = vmatpush1.msra.mxu0 0.0
  %823 = vmatprep.subr.mxu0 0.0
  %824 = vmatpush1.msra.mxu0 0.0
  %825 = vmatprep.subr.mxu0 0.0
  %826 = vmatpush1.msra.mxu0 0.0
  %827 = vmatprep.subr.mxu0 0.0
  %828 = vmatpush1.msra.mxu0 0.0
  %829 = vmatprep.subr.mxu0 0.0
  %830 = vmatpush1.msra.mxu0 0.0
  %831 = vmatprep.subr.mxu0 0.0
  %832 = vmatpush1.msra.mxu0 0.0
  %833 = vmatprep.subr.mxu0 0.0
  %834 = vmatpush1.msra.mxu0 0.0
  %835 = vmatprep.subr.mxu0 0.0
  %836 = vmatpush1.msra.mxu0 0.0
  %837 = vmatprep.subr.mxu0 0.0
  %838 = vmatpush1.msra.mxu0 0.0
  %839 = vmatprep.subr.mxu0 0.0
  %840 = vmatpush1.msra.mxu0 0.0
  %841 = vmatprep.subr.mxu0 0.0
  %842 = vmatpush1.msra.mxu0 0.0
  %843 = vmatprep.subr.mxu0 0.0
  %844 = vmatpush1.msra.mxu0 0.0
  %845 = vmatprep.subr.mxu0 0.0
  %846 = vmatpush1.msra.mxu0 0.0
  %847 = vmatprep.mubr.f32.mxu0 0.0
  %848 = vmatmul.mubr.f32.gmra.mrb[0].mxu0 %v781
  %v849 = vpop.f32.mrb[0].mxu0
  %v850 = vadd.f32 0.0, %v849
  %v851 = vpop.f32.mrb[0].mxu0
  %852 = vdwg.mxu0
  %v853 = vadd.f32 %v317, %v850
  %v854 = vtanh.pop %v853
  %v856 = vsel %vm329, %v854, 0
  %858 = vmatprep.subr.mxu0 0.0
  %859 = vmatpush1.msra.mxu0 %v325
  %860 = vmatprep.subr.mxu0 0.0
  %861 = vmatpush1.msra.mxu0 %v326
  %862 = vmatprep.subr.mxu0 0.0
  %863 = vmatpush1.msra.mxu0 %v327
  %864 = vmatprep.subr.mxu0 0.0
  %865 = vmatpush1.msra.mxu0 %v328
  %866 = vmatprep.subr.mxu0 0.0
  %867 = vmatpush1.msra.mxu0 0.0
  %868 = vmatprep.subr.mxu0 0.0
  %869 = vmatpush1.msra.mxu0 0.0
  %870 = vmatprep.subr.mxu0 0.0
  %871 = vmatpush1.msra.mxu0 0.0
  %872 = vmatprep.subr.mxu0 0.0
  %873 = vmatpush1.msra.mxu0 0.0
  %874 = vmatprep.subr.mxu0 0.0
  %875 = vmatpush1.msra.mxu0 0.0
  %876 = vmatprep.subr.mxu0 0.0
  %877 = vmatpush1.msra.mxu0 0.0
  %878 = vmatprep.subr.mxu0 0.0
  %879 = vmatpush1.msra.mxu0 0.0
  %880 = vmatprep.subr.mxu0 0.0
  %881 = vmatpush1.msra.mxu0 0.0
  %882 = vmatprep.subr.mxu0 0.0
  %883 = vmatpush1.msra.mxu0 0.0
  %884 = vmatprep.subr.mxu0 0.0
  %885 = vmatpush1.msra.mxu0 0.0
  %886 = vmatprep.subr.mxu0 0.0
  %887 = vmatpush1.msra.mxu0 0.0
  %888 = vmatprep.subr.mxu0 0.0
  %889 = vmatpush1.msra.mxu0 0.0
  %890 = vmatprep.subr.mxu0 0.0
  %891 = vmatpush1.msra.mxu0 0.0
  %892 = vmatprep.subr.mxu0 0.0
  %893 = vmatpush1.msra.mxu0 0.0
  %894 = vmatprep.subr.mxu0 0.0
  %895 = vmatpush1.msra.mxu0 0.0
  %896 = vmatprep.subr.mxu0 0.0
  %897 = vmatpush1.msra.mxu0 0.0
  %898 = vmatprep.subr.mxu0 0.0
  %899 = vmatpush1.msra.mxu0 0.0
  %900 = vmatprep.subr.mxu0 0.0
  %901 = vmatpush1.msra.mxu0 0.0
  %902 = vmatprep.subr.mxu0 0.0
  %903 = vmatpush1.msra.mxu0 0.0
  %904 = vmatprep.subr.mxu0 0.0
  %905 = vmatpush1.msra.mxu0 0.0
  %906 = vmatprep.subr.mxu0 0.0
  %907 = vmatpush1.msra.mxu0 0.0
  %908 = vmatprep.subr.mxu0 0.0
  %909 = vmatpush1.msra.mxu0 0.0
  %910 = vmatprep.subr.mxu0 0.0
  %911 = vmatpush1.msra.mxu0 0.0
  %912 = vmatprep.subr.mxu0 0.0
  %913 = vmatpush1.msra.mxu0 0.0
  %914 = vmatprep.subr.mxu0 0.0
  %915 = vmatpush1.msra.mxu0 0.0
  %916 = vmatprep.subr.mxu0 0.0
  %917 = vmatpush1.msra.mxu0 0.0
  %918 = vmatprep.subr.mxu0 0.0
  %919 = vmatpush1.msra.mxu0 0.0
  %920 = vmatprep.subr.mxu0 0.0
  %921 = vmatpush1.msra.mxu0 0.0
  %922 = vmatprep.mubr.f32.mxu0 0.0
  %923 = vmatmul.mubr.f32.gmra.mrb[0].mxu0 %v856
  %v924 = vpop.f32.mrb[0].mxu0
  %v925 = vadd.f32 0.0, %v924
  %v926 = vpop.f32.mrb[0].mxu0
  %927 = vdwg.mxu0
  %v928 = vadd.f32 %v322, %v925
  %v929 = vtanh.pop %v928
  %v930 = vld [vmem:[%s5] sm:$0xff]
  %v931 = vld [vmem:[%s5 + $0x8] sm:$0xff]
  %v932 = vld [vmem:[%s5 + $0x10] sm:$0xff]
  %v933 = vld [vmem:[%s5 + $0x18] sm:$0xff]
  %v934 = vld [vmem:[%s6] sm:$0x1]
  %v936 = vlaneseq
  %v937 = vshrl.u32 %v936, 7
  %v938 = vsub.s32 0, %v937
  %v939 = vrot.slane %v934, %v938
  %v942 = vsel %vm329, %v929, 0
  %944 = vmatprep.subr.mxu0 0.0
  %945 = vmatpush1.msra.mxu0 %v930
  %946 = vmatprep.subr.mxu0 0.0
  %947 = vmatpush1.msra.mxu0 %v931
  %948 = vmatprep.subr.mxu0 0.0
  %949 = vmatpush1.msra.mxu0 %v932
  %950 = vmatprep.subr.mxu0 0.0
  %951 = vmatpush1.msra.mxu0 %v933
  %952 = vmatprep.subr.mxu0 0.0
  %953 = vmatpush1.msra.mxu0 0.0
  %954 = vmatprep.subr.mxu0 0.0
  %955 = vmatpush1.msra.mxu0 0.0
  %956 = vmatprep.subr.mxu0 0.0
  %957 = vmatpush1.msra.mxu0 0.0
  %958 = vmatprep.subr.mxu0 0.0
  %959 = vmatpush1.msra.mxu0 0.0
  %960 = vmatprep.subr.mxu0 0.0
  %961 = vmatpush1.msra.mxu0 0.0
  %962 = vmatprep.subr.mxu0 0.0
  %963 = vmatpush1.msra.mxu0 0.0
  %964 = vmatprep.subr.mxu0 0.0
  %965 = vmatpush1.msra.mxu0 0.0
  %966 = vmatprep.subr.mxu0 0.0
  %967 = vmatpush1.msra.mxu0 0.0
  %968 = vmatprep.subr.mxu0 0.0
  %969 = vmatpush1.msra.mxu0 0.0
  %970 = vmatprep.subr.mxu0 0.0
  %971 = vmatpush1.msra.mxu0 0.0
  %972 = vmatprep.subr.mxu0 0.0
  %973 = vmatpush1.msra.mxu0 0.0
  %974 = vmatprep.subr.mxu0 0.0
  %975 = vmatpush1.msra.mxu0 0.0
  %976 = vmatprep.subr.mxu0 0.0
  %977 = vmatpush1.msra.mxu0 0.0
  %978 = vmatprep.subr.mxu0 0.0
  %979 = vmatpush1.msra.mxu0 0.0
  %980 = vmatprep.subr.mxu0 0.0
  %981 = vmatpush1.msra.mxu0 0.0
  %982 = vmatprep.subr.mxu0 0.0
  %983 = vmatpush1.msra.mxu0 0.0
  %984 = vmatprep.subr.mxu0 0.0
  %985 = vmatpush1.msra.mxu0 0.0
  %986 = vmatprep.subr.mxu0 0.0
  %987 = vmatpush1.msra.mxu0 0.0
  %988 = vmatprep.subr.mxu0 0.0
  %989 = vmatpush1.msra.mxu0 0.0
  %990 = vmatprep.subr.mxu0 0.0
  %991 = vmatpush1.msra.mxu0 0.0
  %992 = vmatprep.subr.mxu0 0.0
  %993 = vmatpush1.msra.mxu0 0.0
  %994 = vmatprep.subr.mxu0 0.0
  %995 = vmatpush1.msra.mxu0 0.0
  %996 = vmatprep.subr.mxu0 0.0
  %997 = vmatpush1.msra.mxu0 0.0
  %998 = vmatprep.subr.mxu0 0.0
  %999 = vmatpush1.msra.mxu0 0.0
  %1000 = vmatprep.subr.mxu0 0.0
  %1001 = vmatpush1.msra.mxu0 0.0
  %1002 = vmatprep.subr.mxu0 0.0
  %1003 = vmatpush1.msra.mxu0 0.0
  %1004 = vmatprep.subr.mxu0 0.0
  %1005 = vmatpush1.msra.mxu0 0.0
  %1006 = vmatprep.subr.mxu0 0.0
  %1007 = vmatpush1.msra.mxu0 0.0
  %1008 = vmatprep.mubr.f32.mxu0 0.0
  %1009 = vmatmul.mubr.f32.gmra.mrb[0].mxu0 %v406
  %v1010 = vpop.f32.mrb[0].mxu0
  %v1011 = vadd.f32 %v939, %v1010
  %v1012 = vpop.f32.mrb[0].mxu0
  %1013 = vmatprep.mubr.f32.mxu0 0.0
  %1014 = vmatmul.mubr.f32.gmra.mrb[0].mxu0 %v481
  %v1015 = vpop.f32.mrb[0].mxu0
  %v1016 = vadd.f32 %v939, %v1015
  %v1017 = vpop.f32.mrb[0].mxu0
  %1018 = vmatprep.mubr.f32.mxu0 0.0
  %1019 = vmatmul.mubr.f32.gmra.mrb[0].mxu0 %v556
  %v1020 = vpop.f32.mrb[0].mxu0
  %v1021 = vadd.f32 %v939, %v1020
  %v1022 = vpop.f32.mrb[0].mxu0
  %1023 = vmatprep.mubr.f32.mxu0 0.0
  %1024 = vmatmul.mubr.f32.gmra.mrb[0].mxu0 %v631
  %v1025 = vpop.f32.mrb[0].mxu0
  %v1026 = vadd.f32 %v939, %v1025
  %v1027 = vpop.f32.mrb[0].mxu0
  %1028 = vmatprep.mubr.f32.mxu0 0.0
  %1029 = vmatmul.mubr.f32.gmra.mrb[0].mxu0 %v706
  %v1030 = vpop.f32.mrb[0].mxu0
  %v1031 = vadd.f32 %v939, %v1030
  %v1032 = vpop.f32.mrb[0].mxu0
  %1033 = vmatprep.mubr.f32.mxu0 0.0
  %1034 = vmatmul.mubr.f32.gmra.mrb[0].mxu0 %v781
  %v1035 = vpop.f32.mrb[0].mxu0
  %v1036 = vadd.f32 %v939, %v1035
  %v1037 = vpop.f32.mrb[0].mxu0
  %1038 = vmatprep.mubr.f32.mxu0 0.0
  %1039 = vmatmul.mubr.f32.gmra.mrb[0].mxu0 %v856
  %v1040 = vpop.f32.mrb[0].mxu0
  %v1041 = vadd.f32 %v939, %v1040
  %v1042 = vpop.f32.mrb[0].mxu0
  %1043 = vmatprep.mubr.f32.mxu0 0.0
  %1044 = vmatmul.mubr.f32.gmra.mrb[0].mxu0 %v942
  %v1045 = vpop.f32.mrb[0].mxu0
  %v1046 = vadd.f32 %v939, %v1045
  %v1047 = vpop.f32.mrb[0].mxu0
  %1048 = vdwg.mxu0
  %1049 = vst [vmem:[%s7] sm:$0xff] %v1011
  %1050 = vst [vmem:[%s7 + $0x8] sm:$0xff] %v1016
  %1051 = vst [vmem:[%s7 + $0x10] sm:$0xff] %v1021
  %1052 = vst [vmem:[%s7 + $0x18] sm:$0xff] %v1026
  %1053 = vst [vmem:[%s7 + $0x20] sm:$0xff] %v1031
  %1054 = vst [vmem:[%s7 + $0x28] sm:$0xff] %v1036
  %1055 = vst [vmem:[%s7 + $0x30] sm:$0xff] %v1041
  %1056 = vst [vmem:[%s7 + $0x38] sm:$0xff] %v1046
  // Predicated region
  $region30: #{rnn_model_forward.1} parent=0 // pred_check
    _
  $region31: #{rnn_model_forward.1} parent=0 // pred_check_branch
    %1058 = sbr.rel (0) target = $region33
  $region32: #{rnn_model_forward.1} parent=0 // pred_region
    _
  $region33: #{rnn_model_forward.1} parent=0 // pred_fallthru
    _
  // Predicated region
  $region34: #{rnn_model_forward.1} parent=0 // pred_check
    _
  $region35: #{rnn_model_forward.1} parent=0 // pred_check_branch
    %1060 = sbr.rel (0) target = $region37
  $region36: #{rnn_model_forward.1} parent=0 // pred_region
    _
  $region37: #{rnn_model_forward.1} parent=0 // pred_fallthru
    _

</llo_original>
